<compile_context>
chip_gen: v6e
topology: v6e:2x2x1
jax: 0.10.0
libtpu: 0.0.40
codegen_flags: <defaults>
</compile_context>

<pallas_src>
import jax
import jax.numpy as jnp
from jax.experimental import pallas as pl
from jax.experimental.pallas import tpu as pltpu

_LANES = 128
_WIDE_LANES = 1024
# VMEM budget for one grid step's pipeline buffers (double-buffered bf16 input
# + f32 output = ~12 B per element).  6 MiB fits every generation's scoped
# default with headroom.
_VMEM_TILE_BUDGET = 6 * 1024 * 1024


def _cast_f32_kernel(a_ref, o_ref):
    # Pure streaming upcast: one VPU cast per tile, lane-dense unmasked stores.
    o_ref[...] = a_ref[...].astype(jnp.float32)


def _round_down_8(x):
    return (x // 8) * 8


def _cast_f32(A):
    """Materialized A.astype(float32).

    Lane-dense Pallas streaming kernel for the common case; plain XLA convert
    for tiny or non-multiple-of-128 element counts, where a standalone Pallas
    call would only add masked partial stores and per-grid-step overhead.
    """
    if A.dtype == jnp.float32:
        return A  # no-op upcast; skip the kernel entirely

    n = A.size
    if n % _LANES != 0 or n < 8 * _LANES:
        # TODO(synk): lane-sparse / tiny case — let XLA do (and fuse) the
        # convert instead of a Pallas kernel with masked partial stores.
        return A.astype(jnp.float32)

    # Lane-dense view: prefer 1024-wide rows (8 contiguous vregs per row ->
    # fewer DMA descriptors) when the row count stays >= 8.
    lane = _WIDE_LANES if (n % _WIDE_LANES == 0 and n // _WIDE_LANES >= 8) else _LANES
    rows = n // lane
    flat = A.reshape(rows, lane)

    # Row tile: capped by the VMEM budget, shrunk so we get >= ~8 grid steps
    # when the array is large enough (pipelining + both v7x TensorCores busy).
    bytes_per_row = lane * (2 * A.dtype.itemsize + 2 * 4)  # dbl-buffered in+out
    cap_rows = max(8, _round_down_8(_VMEM_TILE_BUDGET // bytes_per_row))
    want_rows = max(8, _round_down_8(pl.cdiv(rows, 8)))
    tile_rows = min(cap_rows, want_rows)

    grid = (pl.cdiv(rows, tile_rows),)  # ragged last block is masked by Pallas
    out = pl.pallas_call(
        _cast_f32_kernel,
        out_shape=jax.ShapeDtypeStruct((rows, lane), jnp.float32),
        grid_spec=pltpu.PrefetchScalarGridSpec(
            num_scalar_prefetch=0,
            grid=grid,
            in_specs=[pl.BlockSpec((tile_rows, lane), lambda i: (i, 0))],
            out_specs=pl.BlockSpec((tile_rows, lane), lambda i: (i, 0)),
        ),
        compiler_params=pltpu.CompilerParams(
            dimension_semantics=("parallel",),
        ),
    )(flat)
    return out.reshape(A.shape)


def distance_forward(features, A):
    """Pallas implementation of Distance.forward.

    Returns (a_float, group_scores):
      a_float      : A cast to float32 (stands in for the returned `A.float`,
                     which in PyTorch is a bound method)
      group_scores : a_float[:, :, :4, :4][:, :, None, :, :, None]
    """
    B, C, T_feat, MAX_N = features.shape  # shape unpack only; features unused

    if A.ndim == 3:
        # TODO(synk): original PyTorch sets `A = [None, ...]` (a Python list)
        # here, which would crash on the next line; require a 4-D A instead.
        raise ValueError("Distance.forward requires a 4-D A tensor")

    Ab, At, An1, An2 = A.shape
    assert An1 >= 4 and An2 >= 4

    # A.float(): materialized streaming upcast (Pallas kernel on the fast path).
    a_float = _cast_f32(A)

    # atts / group_scores are tiny (B*T*4*4 elements); slice in plain JAX
    # rather than emitting lane-sparse masked stores from the kernel.
    atts = a_float[:, :, :4, :4]
    group_scores = atts[:, :, None, :, :, None]

    return a_float, group_scores


if __name__ == "__main__":
    key = jax.random.PRNGKey(0)
    kf, ka, ka2 = jax.random.split(key, 3)

    # Shapes consistent with the forward signature:
    # features: (B, C, T, MAX_N); A: (B, T, MAX_N, MAX_N)
    B, C, T, MAX_N = 2, 4, 16, 32
    features = jax.random.normal(kf, (B, C, T, MAX_N), dtype=jnp.float32)
    A = jax.random.normal(ka, (B, T, MAX_N, MAX_N), dtype=jnp.bfloat16)

    a_float, group_scores = distance_forward(features, A)
    jax.block_until_ready((a_float, group_scores))

    # Sanity checks against pure-JAX reference (bf16 -> f32 upcast is exact).
    a_ref = A.astype(jnp.float32)
    gs_ref = a_ref[:, :, :4, :4][:, :, None, :, :, None]
    assert a_float.shape == (B, T, MAX_N, MAX_N) and a_float.dtype == jnp.float32
    assert group_scores.shape == (B, T, 1, 4, 4, 1)
    assert jnp.array_equal(a_float, a_ref)
    assert jnp.array_equal(group_scores, gs_ref)

    # Also exercise the ragged-last-block path: 1*17*8*16 = 2176 elements
    # -> 17 rows of 128 lanes, tile_rows = 8, grid = 3 with a masked last block.
    A2 = jax.random.normal(ka2, (1, 17, 8, 16), dtype=jnp.bfloat16)
    feats2 = jnp.zeros((1, 1, 17, 16), dtype=jnp.float32)
    a2_float, gs2 = distance_forward(feats2, A2)
    jax.block_until_ready((a2_float, gs2))
    assert jnp.array_equal(a2_float, A2.astype(jnp.float32))
    assert gs2.shape == (1, 17, 1, 4, 4, 1)

    print("KERNEL_OK")
</pallas_src>

<mosaic_0001>
module attributes {stable_mosaic.version = 11 : i64} {
  func.func @_cast_f32_kernel(%arg0: i32, %arg1: memref<8x1024xbf16, #tpu.memory_space<vmem>>, %arg2: memref<8x1024xf32, #tpu.memory_space<vmem>>) attributes {dimension_semantics = [#tpu.dimension_semantics<parallel>], iteration_bounds = array<i64: 4>, scalar_prefetch = 0 : i64, scratch_operands = 0 : i64, tpu.core_type = #tpu.core_type<tc>, window_params = [{transform_indices = @transform_0, window_bounds = array<i64: 8, 1024>}, {transform_indices = @transform_1, window_bounds = array<i64: 8, 1024>}]} {
    %c0 = arith.constant 0 : index
    %c0_0 = arith.constant 0 : index
    %0 = vector.load %arg1[%c0, %c0_0] : memref<8x1024xbf16, #tpu.memory_space<vmem>>, vector<8x1024xbf16>
    %1 = arith.extf %0 : vector<8x1024xbf16> to vector<8x1024xf32>
    %c0_1 = arith.constant 0 : index
    %c0_2 = arith.constant 0 : index
    %2 = vector.load %arg2[%c0_1, %c0_2] : memref<8x1024xf32, #tpu.memory_space<vmem>>, vector<8x1024xf32>
    tpu.vector_store %arg2[%c0_1, %c0_2], %1 {strides = array<i32>} : memref<8x1024xf32, #tpu.memory_space<vmem>>, vector<8x1024xf32>,
    return
  }
  func.func @transform_0(%arg0: i32) -> (i32, i32) {
    %c0_i32 = arith.constant 0 : i32
    %c0_i32_0 = arith.constant 0 : i32
    return %arg0, %c0_i32 : i32, i32
  }
  func.func @transform_1(%arg0: i32) -> (i32, i32) {
    %c0_i32 = arith.constant 0 : i32
    %c0_i32_0 = arith.constant 0 : i32
    return %arg0, %c0_i32 : i32, i32
  }
}

</mosaic_0001>

<llo_original>
// kernel: tpu_custom_call.1
$region0: #{tpu_custom_call.1}
  #allocation0 [shape = 'u32[]', space=smem, size = 0x4, offset = 0x4, fixed_abs, tag = 'smem constant byte address 0x4 - core index']
  #allocation1 [shape = 'u32[144,128]{1,0:T(1,128)}', space=vmem, size = 0x12000, scoped, tag = 'internal scratch']
  %s0 = inlined_call_operand.hbm [shape: bf16[32,1024], index: 0, kind: input, shape index: {}]
  %s1 = inlined_call_operand.hbm [shape: f32[32,1024], index: 1, kind: output, shape index: {}]
  %s2 = sld [smem:[#allocation0]]
  $region41: #{tpu_custom_call.1} parent=0
    _
  %s4 = ssub.s32 1, %s2
  %s5 = scalar_select 0, %s4, %s2
  $region1: #{tpu_custom_call.1} parent=0
    #allocation2 [shape = 'u8[32768]{0}', space=vmem, size = 0x8000, scoped, tag = 'input window, operand 0']
    #allocation3 [shape = 's32[2]{0}', space=sflag, size = 0x8, scoped, tag = 'scoped memory for tpu_custom_call.1']
    #allocation4 [shape = 's32[2]{0}', space=sflag, size = 0x8, scoped, tag = 'scoped memory for tpu_custom_call.1']
    #allocation5 [shape = 'u8[65536]{0}', space=vmem, size = 0x10000, scoped, tag = 'output window, operand 0']
    %6 = vsyncpa [#allocation3], 0
    %s7 = scalar_lea.sflag [#allocation3], 1
    %8 = vsyncpa %s7, 0
    %9 = vsyncpa [#allocation4], 0
    %s10 = scalar_lea.sflag [#allocation4], 1
    %11 = vsyncpa %s10, 0
    loop: start=0, step=1, limit=6
    $region2: #{tpu_custom_call.1} parent=1 // loop_pre_header
      _
    $region3: #{tpu_custom_call.1} parent=1 // loop_header
      %s13 = sphi 0, %s17
      %p14 = scmp.ge.s32.totalorder %s13, 6
      %s23 = sphi 0, %s25
      %s26 = sphi 0, %s23
      %s27 = sphi 0, %s26
      %s43 = sphi 0, %s27
      %s49 = sphi 0, %s51
      %s52 = sphi 0, %s49
      %s53 = sphi 0, %s52
      %s69 = sphi 0, %s53
    $region4: #{tpu_custom_call.1} parent=1 // loop_header_branch
      %16 = sbr.rel (%p14) target = $region8
    $region5: #{tpu_custom_call.1} parent=1 // loop_body
      %s18 = ssub.s32 %s13, 1
      %s19 = ssub.s32 %s13, 2
      %s20 = sadd.s32 %s13, 1
      %s21 = ssub.s32 %s13, %s20
      %p22 = scmp.eq.s32.totalorder %s21, 0
      %s24 = sadd.s32 %s23, 1
      %s25 = scalar_select %p22, %s23, %s24
      %p28 = pneg %p22
      %p29 = scmp.eq.s32.totalorder %s13, 3
      %p30 = por %p28, %p29
      %p31 = scmp.ne.s32.totalorder %s23, %s26
      %p32 = scmp.eq.s32.totalorder %s13, 0
      %p33 = por %p31, %p32
      %p34 = scmp.ne.s32.totalorder %s23, %s26
      %p35 = scmp.eq.s32.totalorder %s18, 3
      %p36 = por %p34, %p35
      %p37 = scmp.ne.s32.totalorder %s26, %s27
      %p38 = scmp.eq.s32.totalorder %s18, 0
      %p39 = por %p37, %p38
      %p40 = scmp.ne.s32.totalorder %s26, %s27
      %p41 = scmp.eq.s32.totalorder %s19, 3
      %p42 = por %p40, %p41
      %p44 = scmp.ne.s32.totalorder %s27, %s43
      %p45 = scmp.eq.s32.totalorder %s19, 0
      %p46 = por %p44, %p45
      %s47 = ssub.s32 %s13, %s20
      %p48 = scmp.eq.s32.totalorder %s47, 0
      %s50 = sadd.s32 %s49, 1
      %s51 = scalar_select %p48, %s49, %s50
      %p54 = pneg %p48
      %p55 = scmp.eq.s32.totalorder %s13, 3
      %p56 = por %p54, %p55
      %p57 = scmp.ne.s32.totalorder %s49, %s52
      %p58 = scmp.eq.s32.totalorder %s13, 0
      %p59 = por %p57, %p58
      %p60 = scmp.ne.s32.totalorder %s49, %s52
      %p61 = scmp.eq.s32.totalorder %s18, 3
      %p62 = por %p60, %p61
      %p63 = scmp.ne.s32.totalorder %s52, %s53
      %p64 = scmp.eq.s32.totalorder %s18, 0
      %p65 = por %p63, %p64
      %p66 = scmp.ne.s32.totalorder %s52, %s53
      %p67 = scmp.eq.s32.totalorder %s19, 3
      %p68 = por %p66, %p67
      %p70 = scmp.ne.s32.totalorder %s53, %s69
      %p71 = scmp.eq.s32.totalorder %s19, 0
      %p72 = por %p70, %p71
      %p73 = scmp.le.s32.totalorder 1, %s13
      %p74 = scmp.lt.s32.totalorder %s13, 5
      %p75 = pnand %p73, %p74
      %p76 = pneg %p75
      // Predicated region
      $region9: #{tpu_custom_call.1} parent=5 // pred_check
        _
      $region10: #{tpu_custom_call.1} parent=5 // pred_check_branch
        %78 = sbr.rel (%p75) target = $region12
      $region11: #{tpu_custom_call.1} parent=5 // pred_region
        %s79 = ssub.s32 %s13, 1
      $region12: #{tpu_custom_call.1} parent=5 // pred_fallthru
        _
      %p80 = scmp.lt.s32.totalorder %s13, 4
      // Predicated region
      $region13: #{tpu_custom_call.1} parent=5 // pred_check
        %p81 = pneg %p80
      $region14: #{tpu_custom_call.1} parent=5 // pred_check_branch
        %83 = sbr.rel (%p81) target = $region16
      $region15: #{tpu_custom_call.1} parent=5 // pred_region
        // Predicated region
        $region17: #{tpu_custom_call.1} parent=15 // pred_check
          %p84 = pneg %p33
        $region18: #{tpu_custom_call.1} parent=15 // pred_check_branch
          %86 = sbr.rel (%p84) target = $region20
        $region19: #{tpu_custom_call.1} parent=15 // pred_region
          %s87 = sand.u32 %s23, 1
          %s88 = scalar_lea.sflag [#allocation3], %s87
          %s89 = sand.u32 %s23, 1
          %s90 = smul.addr %s89, 32
          %s91 = scalar_lea.vmem [#allocation2], %s90
          %s93 = ssub.s32 512, 512
          %94 = vsyncadd %s88, %s93
          %s95 = smul.addr %s13, 8
          %s96 = smul.addr %s95, 64
          %s97 = scalar_lea.hbm %s0, %s96
          %s99 = sshll.u32 %s91, 4
          %s100 = int_to_ptr.vmem [resolvable:$true] %s99
          %102 = dma.hbm_to_vmem [thread:$0]  %s97, 512, %s100, %s88
        $region20: #{tpu_custom_call.1} parent=15 // pred_fallthru
          _
      $region16: #{tpu_custom_call.1} parent=5 // pred_fallthru
        _
      %p103 = scmp.le.s32.totalorder 1, %s13
      %p104 = scmp.lt.s32.totalorder %s13, 5
      %p105 = pnand %p103, %p104
      %p106 = pneg %p105
      // Predicated region
      $region21: #{tpu_custom_call.1} parent=5 // pred_check
        _
      $region22: #{tpu_custom_call.1} parent=5 // pred_check_branch
        %108 = sbr.rel (%p105) target = $region24
      $region23: #{tpu_custom_call.1} parent=5 // pred_region
        %s109 = ssub.s32 %s13, 1
        %s110 = sand.u32 %s26, 1
        %s111 = scalar_lea.sflag [#allocation3], %s110
        %s112 = sand.u32 %s26, 1
        %s113 = smul.addr %s112, 32
        %s114 = scalar_lea.vmem [#allocation2], %s113
        // Predicated region
        $region25: #{tpu_custom_call.1} parent=23 // pred_check
          %p115 = pneg %p39
        $region26: #{tpu_custom_call.1} parent=23 // pred_check_branch
          %117 = sbr.rel (%p115) target = $region28
        $region27: #{tpu_custom_call.1} parent=23 // pred_region
          %118 = dma.done %s111, 512
        $region28: #{tpu_custom_call.1} parent=23 // pred_fallthru
          _
        %s119 = sand.u32 %s26, 1
        %s120 = scalar_lea.sflag [#allocation3], %s119
        %s121 = sand.u32 %s26, 1
        %s122 = smul.addr %s121, 32
        %s123 = scalar_lea.vmem [#allocation2], %s122
        %p124 = pneg %p39
        %p125 = pneg %p36
        %p126 = pneg %p65
        %p127 = pneg %p62
        %s128 = sand.u32 %s52, 1
        %s129 = scalar_lea.sflag [#allocation4], %s128
        %s130 = sand.u32 %s52, 1
        %s131 = smul.addr %s130, 64
        %s132 = scalar_lea.vmem [#allocation5], %s131
        %v133 = vld [vmem:[%s114] sm:$0xff]
        %v134 = vld [vmem:[%s114 + $0x8] sm:$0xff]
        %v135 = vld [vmem:[%s114 + $0x10] sm:$0xff]
        %v136 = vld [vmem:[%s114 + $0x18] sm:$0xff]
        %v137 = vunpack.c.l.bf16 %v133
        %v138 = vunpack.c.h.bf16 %v133
        %v139 = vunpack.c.l.bf16 %v134
        %v140 = vunpack.c.h.bf16 %v134
        %v141 = vunpack.c.l.bf16 %v135
        %v142 = vunpack.c.h.bf16 %v135
        %v143 = vunpack.c.l.bf16 %v136
        %v144 = vunpack.c.h.bf16 %v136
        %145 = vst [vmem:[%s132] sm:$0xff] %v137
        %146 = vst [vmem:[%s132 + $0x8] sm:$0xff] %v138
        %147 = vst [vmem:[%s132 + $0x10] sm:$0xff] %v139
        %148 = vst [vmem:[%s132 + $0x18] sm:$0xff] %v140
        %149 = vst [vmem:[%s132 + $0x20] sm:$0xff] %v141
        %150 = vst [vmem:[%s132 + $0x28] sm:$0xff] %v142
        %151 = vst [vmem:[%s132 + $0x30] sm:$0xff] %v143
        %152 = vst [vmem:[%s132 + $0x38] sm:$0xff] %v144
        %s153 = sand.u32 %s52, 1
        %s154 = scalar_lea.sflag [#allocation4], %s153
        %s155 = sand.u32 %s52, 1
        %s156 = smul.addr %s155, 64
        %s157 = scalar_lea.vmem [#allocation5], %s156
        // Predicated region
        $region29: #{tpu_custom_call.1} parent=23 // pred_check
          %p158 = pneg %p62
        $region30: #{tpu_custom_call.1} parent=23 // pred_check_branch
          %160 = sbr.rel (%p158) target = $region32
        $region31: #{tpu_custom_call.1} parent=23 // pred_region
          %s162 = ssub.s32 1024, 1024
          %163 = vsyncadd %s154, %s162
          %s164 = smul.addr %s18, 8
          %s165 = smul.addr %s164, 128
          %s166 = scalar_lea.hbm %s1, %s165
          %s168 = sshll.u32 %s157, 4
          %s169 = int_to_ptr.vmem [resolvable:$true] %s168
          %171 = dma.vmem_to_hbm [thread:$0]  %s169, 1024, %s166, %s154
        $region32: #{tpu_custom_call.1} parent=23 // pred_fallthru
          _
      $region24: #{tpu_custom_call.1} parent=5 // pred_fallthru
        _
      %p172 = scmp.le.s32.totalorder 2, %s13
      // Predicated region
      $region33: #{tpu_custom_call.1} parent=5 // pred_check
        %p173 = pneg %p172
      $region34: #{tpu_custom_call.1} parent=5 // pred_check_branch
        %175 = sbr.rel (%p173) target = $region36
      $region35: #{tpu_custom_call.1} parent=5 // pred_region
        %s176 = ssub.s32 %s13, 2
        // Predicated region
        $region37: #{tpu_custom_call.1} parent=35 // pred_check
          %p177 = pneg %p68
        $region38: #{tpu_custom_call.1} parent=35 // pred_check_branch
          %179 = sbr.rel (%p177) target = $region40
        $region39: #{tpu_custom_call.1} parent=35 // pred_region
          %s180 = sand.u32 %s53, 1
          %s181 = scalar_lea.sflag [#allocation4], %s180
          %s182 = sand.u32 %s53, 1
          %s183 = smul.addr %s182, 64
          %s184 = scalar_lea.vmem [#allocation5], %s183
          %185 = dma.done %s181, 1024
        $region40: #{tpu_custom_call.1} parent=35 // pred_fallthru
          _
      $region36: #{tpu_custom_call.1} parent=5 // pred_fallthru
        _
    $region6: #{tpu_custom_call.1} parent=1 // loop_footer
      %s17 = sadd.s32 1, %s13
    $region7: #{tpu_custom_call.1} parent=1 // loop_footer_branch
      %12 = sbr.rel target = $region3
    $region8: #{tpu_custom_call.1} parent=1 // loop_exit
      _
    %186 = vsyncpa [#allocation3], 1
    %s187 = scalar_lea.sflag [#allocation3], 1
    %188 = vsyncpa %s187, 1
    %189 = vsyncpa [#allocation4], 1
    %s190 = scalar_lea.sflag [#allocation4], 1
    %191 = vsyncpa %s190, 1

</llo_original>
